<compile_context>
chip_gen: v7x
topology: tpu7x:2x2x1
jax: 0.10.0
libtpu: 0.0.40
codegen_flags: <defaults>
</compile_context>

<pallas_src>
import functools

import jax
import jax.numpy as jnp
from jax.experimental import pallas as pl
from jax.experimental.pallas import tpu as pltpu


def _round_up(a: int, b: int) -> int:
    return -(-a // b) * b


# ---------------------------------------------------------------------------
# Kernel bodies
# ---------------------------------------------------------------------------
def _kernel_mxu_dense(x_ref, w_ref, b_ref, o_ref):
    """x_ref: (tr, lanes) f32, w_ref: (lanes, pack) block-diagonal weight,
    b_ref: (1, 1) SMEM scalar, o_ref: (tr*pack/128, 128) lane-dense output."""
    acc = jnp.dot(x_ref[...], w_ref[...],
                  preferred_element_type=jnp.float32)          # (tr, pack) on the MXU
    acc = acc + b_ref[0, 0]
    tr, pack = acc.shape
    # Relayout to a 128-lane-dense output block. Batch order is preserved:
    # local flat index r*pack + j == batch row within the tile.
    o_ref[...] = acc.reshape(tr * pack // 128, 128).astype(o_ref.dtype)


def _kernel_vpu_sparse(x_ref, w_ref, b_ref, o_ref, *, pack, feat):
    """Conservative fallback: VPU multiply + per-group lane reduce, (tr, pack) store."""
    x = x_ref[...]                                              # (tr, lanes)
    w = w_ref[...]                                              # (1, lanes)
    cols = []
    for g in range(pack):                                       # unrolled at trace time
        lo, hi = g * feat, (g + 1) * feat
        cols.append(jnp.sum(x[:, lo:hi] * w[:, lo:hi], axis=1, keepdims=True))
    acc = cols[0] if pack == 1 else jnp.concatenate(cols, axis=1)   # (tr, pack)
    o_ref[...] = (acc + b_ref[0, 0]).astype(o_ref.dtype)


# ---------------------------------------------------------------------------
# pallas_call builder for the packed main part
# ---------------------------------------------------------------------------
def _run_packed(x_packed, weight, bias, *, pack, feat, tile_rows, dense_out):
    """x_packed: (rows, pack*feat). Returns batch-ordered flat results (>= rows*pack)."""
    rows, lanes = x_packed.shape
    dtype = x_packed.dtype

    # Tile quantum keeps the dense output block's sublane dim a multiple of 8.
    q = max(8, 1024 // pack)
    target = _round_up(tile_rows if tile_rows is not None else (8192 if dense_out else 4096), q)
    # Prefer >= 2 grid steps when there is enough work (v7x megacore sharding).
    tr = max(q, min(target, _round_up(max(rows // 2, 1), q)))
    grid = pl.cdiv(rows, tr)            # partial last block: garbage rows are discarded

    b_smem = bias.reshape(1, 1).astype(jnp.float32)
    w_vec = weight.reshape(feat).astype(dtype)

    if dense_out:
        # Block-diagonal weight: W_bd[j*feat + f, j] = w[f] -> one MXU dot per tile.
        w_arr = (jnp.eye(pack, dtype=dtype)[:, None, :]
                 * w_vec[None, :, None]).reshape(lanes, pack)
        w_spec = pl.BlockSpec((lanes, pack), lambda i: (0, 0))
        orb = tr * pack // 128          # output rows per block, multiple of 8 by construction
        kernel = _kernel_mxu_dense
        out_shape = jax.ShapeDtypeStruct((grid * orb, 128), dtype)
        out_spec = pl.BlockSpec((orb, 128), lambda i: (i, 0))
    else:
        w_arr = jnp.tile(w_vec.reshape(1, feat), (1, pack))     # (1, lanes)
        w_spec = pl.BlockSpec((1, lanes), lambda i: (0, 0))
        kernel = functools.partial(_kernel_vpu_sparse, pack=pack, feat=feat)
        out_shape = jax.ShapeDtypeStruct((grid * tr, pack), dtype)
        out_spec = pl.BlockSpec((tr, pack), lambda i: (i, 0))

    out = pl.pallas_call(
        kernel,
        out_shape=out_shape,
        grid_spec=pltpu.PrefetchScalarGridSpec(
            num_scalar_prefetch=0,
            grid=(grid,),
            in_specs=[
                pl.BlockSpec((tr, lanes), lambda i: (i, 0)),            # streamed x tiles
                w_spec,                                                  # VMEM-resident weight
                pl.BlockSpec(memory_space=pltpu.MemorySpace.SMEM),       # bias scalar
            ],
            out_specs=out_spec,
        ),
        compiler_params=pltpu.CompilerParams(dimension_semantics=("parallel",)),
    )(x_packed, w_arr, b_smem)

    return out.reshape(-1)              # batch-ordered flat results (length grid*tr*pack)


# ---------------------------------------------------------------------------
# Public wrapper (matches nn.Linear(F, 1) forward)
# ---------------------------------------------------------------------------
_DENSE_OUT_OK = True     # flipped to False if the lane-dense relayout fails to lower
_DENSE_PROBED = False


def linear_regression(x, weight, bias, *, tile_rows=None):
    """x: (B, F), weight: (1, F) (PyTorch layout), bias: (1,) -> (B, 1)."""
    global _DENSE_OUT_OK, _DENSE_PROBED
    B, F = x.shape
    dtype = x.dtype

    # Fold `pack` consecutive batch rows into the 128-lane dim when F divides 128.
    pack = 128 // F if (F <= 128 and 128 % F == 0) else 1
    lanes = pack * F

    rem = B % pack
    main = B - rem

    pieces = []
    if main > 0:
        # Row-major metadata reshape; free (no HBM copy) whenever B % pack == 0.
        x_main = x if rem == 0 else x[:main]
        x_packed = x_main.reshape(main // pack, lanes)

        y_flat = None
        if _DENSE_OUT_OK:
            try:
                y = _run_packed(x_packed, weight, bias, pack=pack, feat=F,
                                tile_rows=tile_rows, dense_out=True)
                if not _DENSE_PROBED:
                    y = jax.block_until_ready(y)   # surface any lowering/runtime issue once
                    _DENSE_PROBED = True
                y_flat = y
            except Exception:
                _DENSE_OUT_OK = False              # fall back to the conservative path
        if y_flat is None:
            y_flat = _run_packed(x_packed, weight, bias, pack=pack, feat=F,
                                 tile_rows=tile_rows, dense_out=False)
        pieces.append(y_flat[:main].reshape(main, 1))

    if rem > 0:
        # Tiny tail (< pack rows): plain JAX, negligible cost, avoids padding all of x.
        pieces.append(x[main:] @ weight.reshape(F, 1).astype(dtype)
                      + bias.reshape(1, 1).astype(dtype))

    return pieces[0] if len(pieces) == 1 else jnp.concatenate(pieces, axis=0)


if __name__ == "__main__":
    key = jax.random.PRNGKey(0)
    n = 33                               # LinearRegression(n) -> nn.Linear(32, 1)
    in_features = n - 1
    batch = 8

    kx, kw, kb = jax.random.split(key, 3)
    x = jax.random.normal(kx, (batch, in_features), dtype=jnp.float32)
    bound = 1.0 / float(in_features) ** 0.5
    weight = jax.random.uniform(kw, (1, in_features), jnp.float32, -bound, bound)
    bias = jax.random.uniform(kb, (1,), jnp.float32, -bound, bound)

    out = jax.block_until_ready(linear_regression(x, weight, bias))
    ref = x @ weight.T + bias
    assert out.shape == (batch, 1), out.shape
    assert jnp.allclose(out, ref, atol=1e-4, rtol=1e-4), float(jnp.max(jnp.abs(out - ref)))

    # Exercise the multi-block + partial-last-block + remainder-row path
    # (grid >= 2 and B % pack != 0), no padding copies of x.
    big_batch = 1037
    xb = jax.random.normal(kx, (big_batch, in_features), dtype=jnp.float32)
    out_b = jax.block_until_ready(linear_regression(xb, weight, bias))
    ref_b = xb @ weight.T + bias
    assert out_b.shape == (big_batch, 1), out_b.shape
    assert jnp.allclose(out_b, ref_b, atol=1e-4, rtol=1e-4), float(jnp.max(jnp.abs(out_b - ref_b)))

    print("KERNEL_OK")
</pallas_src>

<mosaic_0001>
module attributes {stable_mosaic.version = 11 : i64} {
  func.func @_kernel_mxu_dense(%arg0: i32, %arg1: memref<256x128xf32, #tpu.memory_space<vmem>>, %arg2: memref<128x4xf32, #tpu.memory_space<vmem>>, %arg3: memref<1x1xf32, #tpu.memory_space<smem>>, %arg4: memref<8x128xf32, #tpu.memory_space<vmem>>) attributes {dimension_semantics = [#tpu.dimension_semantics<parallel>], iteration_bounds = array<i64: 1>, scalar_prefetch = 0 : i64, scratch_operands = 0 : i64, tpu.core_type = #tpu.core_type<tc>, window_params = [{transform_indices = @transform_0, window_bounds = array<i64: 256, 128>}, {pipeline_mode = #tpu.pipeline_mode<synchronous>, transform_indices = @transform_1, window_bounds = array<i64: 128, 4>}, {transform_indices = @transform_2, window_bounds = array<i64: 1, 1>}, {transform_indices = @transform_3, window_bounds = array<i64: 8, 128>}]} {
    %c0 = arith.constant 0 : index
    %c0_0 = arith.constant 0 : index
    %0 = vector.load %arg1[%c0, %c0_0] : memref<256x128xf32, #tpu.memory_space<vmem>>, vector<256x128xf32>
    %c0_1 = arith.constant 0 : index
    %c0_2 = arith.constant 0 : index
    %1 = vector.load %arg2[%c0_1, %c0_2] : memref<128x4xf32, #tpu.memory_space<vmem>>, vector<128x4xf32>
    %cst = arith.constant dense<0.000000e+00> : vector<256x4xf32>
    %2 = tpu.matmul %0, %1, %cst {dimension_numbers = #tpu.dot_dimension_numbers<[1], [0], [0], [1], [0, 0, 1, 1], [], []>} : vector<256x128xf32>, vector<128x4xf32>, vector<256x4xf32> -> vector<256x4xf32>
    %c0_3 = arith.constant 0 : index
    %c0_4 = arith.constant 0 : index
    %3 = memref.load %arg3[%c0_3, %c0_4] : memref<1x1xf32, #tpu.memory_space<smem>>
    %4 = vector.broadcast %3 : f32 to vector<256x4xf32>
    %5 = arith.addf %2, %4 : vector<256x4xf32>
    %6 = vector.shape_cast %5 : vector<256x4xf32> to vector<8x128xf32>
    %c0_5 = arith.constant 0 : index
    %c0_6 = arith.constant 0 : index
    %7 = vector.load %arg4[%c0_5, %c0_6] : memref<8x128xf32, #tpu.memory_space<vmem>>, vector<8x128xf32>
    tpu.vector_store %arg4[%c0_5, %c0_6], %6 {strides = array<i32>} : memref<8x128xf32, #tpu.memory_space<vmem>>, vector<8x128xf32>,
    return
  }
  func.func @transform_0(%arg0: i32) -> (i32, i32) {
    %c0_i32 = arith.constant 0 : i32
    %c0_i32_0 = arith.constant 0 : i32
    return %arg0, %c0_i32 : i32, i32
  }
  func.func @transform_1(%arg0: i32) -> (i32, i32) {
    %c0_i32 = arith.constant 0 : i32
    %c0_i32_0 = arith.constant 0 : i32
    %c0_i32_1 = arith.constant 0 : i32
    return %c0_i32, %c0_i32_0 : i32, i32
  }
  func.func @transform_2(%arg0: i32) -> (i32, i32) {
    %c0_i32 = arith.constant 0 : i32
    %c0_i32_0 = arith.constant 0 : i32
    %c0_i32_1 = arith.constant 0 : i32
    return %c0_i32, %c0_i32_0 : i32, i32
  }
  func.func @transform_3(%arg0: i32) -> (i32, i32) {
    %c0_i32 = arith.constant 0 : i32
    %c0_i32_0 = arith.constant 0 : i32
    return %arg0, %c0_i32 : i32, i32
  }
}

module attributes {stable_mosaic.version = 11 : i64} {
  func.func @_kernel_vpu_sparse(%arg0: i32, %arg1: memref<256x128xf32, #tpu.memory_space<vmem>>, %arg2: memref<1x128xf32, #tpu.memory_space<vmem>>, %arg3: memref<1x1xf32, #tpu.memory_space<smem>>, %arg4: memref<256x4xf32, #tpu.memory_space<vmem>>) attributes {dimension_semantics = [#tpu.dimension_semantics<parallel>], iteration_bounds = array<i64: 1>, scalar_prefetch = 0 : i64, scratch_operands = 0 : i64, tpu.core_type = #tpu.core_type<tc>, window_params = [{transform_indices = @transform_0, window_bounds = array<i64: 256, 128>}, {pipeline_mode = #tpu.pipeline_mode<synchronous>, transform_indices = @transform_1, window_bounds = array<i64: 1, 128>}, {transform_indices = @transform_2, window_bounds = array<i64: 1, 1>}, {transform_indices = @transform_3, window_bounds = array<i64: 256, 4>}]} {
    %c0 = arith.constant 0 : index
    %c0_0 = arith.constant 0 : index
    %0 = vector.load %arg1[%c0, %c0_0] : memref<256x128xf32, #tpu.memory_space<vmem>>, vector<256x128xf32>
    %c0_1 = arith.constant 0 : index
    %c0_2 = arith.constant 0 : index
    %1 = vector.load %arg2[%c0_1, %c0_2] : memref<1x128xf32, #tpu.memory_space<vmem>>, vector<1x128xf32>
    %2 = vector.extract_strided_slice %0 {offsets = [0, 0], sizes = [256, 32], strides = [1, 1]} : vector<256x128xf32> to vector<256x32xf32>
    %3 = vector.extract_strided_slice %1 {offsets = [0, 0], sizes = [1, 32], strides = [1, 1]} : vector<1x128xf32> to vector<1x32xf32>
    %4 = vector.broadcast %3 : vector<1x32xf32> to vector<256x32xf32>
    %5 = arith.mulf %2, %4 : vector<256x32xf32>
    %cst = arith.constant dense<0.000000e+00> : vector<256xf32>
    %6 = vector.multi_reduction <add>, %5, %cst [1] : vector<256x32xf32> to vector<256xf32>
    %7 = vector.shape_cast %6 : vector<256xf32> to vector<256x1xf32>
    %8 = vector.extract_strided_slice %0 {offsets = [0, 32], sizes = [256, 32], strides = [1, 1]} : vector<256x128xf32> to vector<256x32xf32>
    %9 = vector.extract_strided_slice %1 {offsets = [0, 32], sizes = [1, 32], strides = [1, 1]} : vector<1x128xf32> to vector<1x32xf32>
    %10 = vector.broadcast %9 : vector<1x32xf32> to vector<256x32xf32>
    %11 = arith.mulf %8, %10 : vector<256x32xf32>
    %cst_3 = arith.constant dense<0.000000e+00> : vector<256xf32>
    %12 = vector.multi_reduction <add>, %11, %cst_3 [1] : vector<256x32xf32> to vector<256xf32>
    %13 = vector.shape_cast %12 : vector<256xf32> to vector<256x1xf32>
    %14 = vector.extract_strided_slice %0 {offsets = [0, 64], sizes = [256, 32], strides = [1, 1]} : vector<256x128xf32> to vector<256x32xf32>
    %15 = vector.extract_strided_slice %1 {offsets = [0, 64], sizes = [1, 32], strides = [1, 1]} : vector<1x128xf32> to vector<1x32xf32>
    %16 = vector.broadcast %15 : vector<1x32xf32> to vector<256x32xf32>
    %17 = arith.mulf %14, %16 : vector<256x32xf32>
    %cst_4 = arith.constant dense<0.000000e+00> : vector<256xf32>
    %18 = vector.multi_reduction <add>, %17, %cst_4 [1] : vector<256x32xf32> to vector<256xf32>
    %19 = vector.shape_cast %18 : vector<256xf32> to vector<256x1xf32>
    %20 = vector.extract_strided_slice %0 {offsets = [0, 96], sizes = [256, 32], strides = [1, 1]} : vector<256x128xf32> to vector<256x32xf32>
    %21 = vector.extract_strided_slice %1 {offsets = [0, 96], sizes = [1, 32], strides = [1, 1]} : vector<1x128xf32> to vector<1x32xf32>
    %22 = vector.broadcast %21 : vector<1x32xf32> to vector<256x32xf32>
    %23 = arith.mulf %20, %22 : vector<256x32xf32>
    %cst_5 = arith.constant dense<0.000000e+00> : vector<256xf32>
    %24 = vector.multi_reduction <add>, %23, %cst_5 [1] : vector<256x32xf32> to vector<256xf32>
    %25 = vector.shape_cast %24 : vector<256xf32> to vector<256x1xf32>
    %26 = tpu.concatenate %7, %13, %19, %25 in 1 : vector<256x1xf32>, vector<256x1xf32>, vector<256x1xf32>, vector<256x1xf32> -> vector<256x4xf32>
    %c0_6 = arith.constant 0 : index
    %c0_7 = arith.constant 0 : index
    %27 = memref.load %arg3[%c0_6, %c0_7] : memref<1x1xf32, #tpu.memory_space<smem>>
    %28 = vector.broadcast %27 : f32 to vector<256x4xf32>
    %29 = arith.addf %26, %28 : vector<256x4xf32>
    %c0_8 = arith.constant 0 : index
    %c0_9 = arith.constant 0 : index
    %30 = vector.load %arg4[%c0_8, %c0_9] : memref<256x4xf32, #tpu.memory_space<vmem>>, vector<256x4xf32>
    tpu.vector_store %arg4[%c0_8, %c0_9], %29 {strides = array<i32>} : memref<256x4xf32, #tpu.memory_space<vmem>>, vector<256x4xf32>,
    return
  }
  func.func @transform_0(%arg0: i32) -> (i32, i32) {
    %c0_i32 = arith.constant 0 : i32
    %c0_i32_0 = arith.constant 0 : i32
    return %arg0, %c0_i32 : i32, i32
  }
  func.func @transform_1(%arg0: i32) -> (i32, i32) {
    %c0_i32 = arith.constant 0 : i32
    %c0_i32_0 = arith.constant 0 : i32
    %c0_i32_1 = arith.constant 0 : i32
    return %c0_i32, %c0_i32_0 : i32, i32
  }
  func.func @transform_2(%arg0: i32) -> (i32, i32) {
    %c0_i32 = arith.constant 0 : i32
    %c0_i32_0 = arith.constant 0 : i32
    %c0_i32_1 = arith.constant 0 : i32
    return %c0_i32, %c0_i32_0 : i32, i32
  }
  func.func @transform_3(%arg0: i32) -> (i32, i32) {
    %c0_i32 = arith.constant 0 : i32
    %c0_i32_0 = arith.constant 0 : i32
    return %arg0, %c0_i32 : i32, i32
  }
}

</mosaic_0001>

<llo_original>
// kernel: tpu_custom_call.1
$region0: #{tpu_custom_call.1}
  #allocation0 [shape = 'u32[]', space=smem, size = 0x4, offset = 0x4, fixed_abs, tag = 'smem constant byte address 0x4 - core index']
  #allocation1 [shape = 'u32[144,128]{1,0:T(1,128)}', space=vmem, size = 0x12000, scoped, tag = 'internal scratch']
  #allocation2 [shape = 'f32[1,1]{1,0:T(1,128)S(6)}', space=smem, size = 0x200, scoped, tag = 'scoped memory for tpu_custom_call.1']
  %s0 = inlined_call_operand.vmem [shape: f32[2,128], index: 0, kind: input, shape index: {}]
  %s1 = inlined_call_operand.vmem [shape: f32[1,128], index: 1, kind: input, shape index: {}]
  %s2 = inlined_call_operand.<no memory space> [shape: f32[1,1], index: 2, kind: input, shape index: {}]
  %s3 = inlined_call_operand.vmem [shape: f32[256,4], index: 3, kind: output, shape index: {}]
  %s4 = sld [smem:[#allocation0]]
  $region22: #{tpu_custom_call.1} parent=0
    _
  %s6 = ssub.s32 1, %s4
  %s7 = scalar_select 0, %s6, %s4
  %8 = sst [smem:[#allocation2]] %s2
  // Predicated region
  $region2: #{tpu_custom_call.1} parent=0 // pred_check
    _
  $region3: #{tpu_custom_call.1} parent=0 // pred_check_branch
    %10 = sbr.rel (0) target = $region5
  $region4: #{tpu_custom_call.1} parent=0 // pred_region
    _
  $region5: #{tpu_custom_call.1} parent=0 // pred_fallthru
    _
  // Predicated region
  $region6: #{tpu_custom_call.1} parent=0 // pred_check
    _
  $region7: #{tpu_custom_call.1} parent=0 // pred_check_branch
    %12 = sbr.rel (0) target = $region9
  $region8: #{tpu_custom_call.1} parent=0 // pred_region
    _
  $region9: #{tpu_custom_call.1} parent=0 // pred_fallthru
    _
  // Predicated region
  $region10: #{tpu_custom_call.1} parent=0 // pred_check
    _
  $region11: #{tpu_custom_call.1} parent=0 // pred_check_branch
    %14 = sbr.rel (0) target = $region13
  $region12: #{tpu_custom_call.1} parent=0 // pred_region
    _
  $region13: #{tpu_custom_call.1} parent=0 // pred_fallthru
    _
  %v15 = vld [vmem:[%s0] sm:$0xff]
  %v16 = vld [vmem:[%s0 + $0x8] sm:$0xff]
  %v17 = vld [vmem:[%s0 + $0x10] sm:$0xff]
  %v18 = vld [vmem:[%s0 + $0x18] sm:$0xff]
  %v19 = vld [vmem:[%s0 + $0x20] sm:$0xff]
  %v20 = vld [vmem:[%s0 + $0x28] sm:$0xff]
  %v21 = vld [vmem:[%s0 + $0x30] sm:$0xff]
  %v22 = vld [vmem:[%s0 + $0x38] sm:$0xff]
  %v23 = vld [vmem:[%s0 + $0x40] sm:$0xff]
  %v24 = vld [vmem:[%s0 + $0x48] sm:$0xff]
  %v25 = vld [vmem:[%s0 + $0x50] sm:$0xff]
  %v26 = vld [vmem:[%s0 + $0x58] sm:$0xff]
  %v27 = vld [vmem:[%s0 + $0x60] sm:$0xff]
  %v28 = vld [vmem:[%s0 + $0x68] sm:$0xff]
  %v29 = vld [vmem:[%s0 + $0x70] sm:$0xff]
  %v30 = vld [vmem:[%s0 + $0x78] sm:$0xff]
  %v31 = vld [vmem:[%s0 + $0x80] sm:$0xff]
  %v32 = vld [vmem:[%s0 + $0x88] sm:$0xff]
  %v33 = vld [vmem:[%s0 + $0x90] sm:$0xff]
  %v34 = vld [vmem:[%s0 + $0x98] sm:$0xff]
  %v35 = vld [vmem:[%s0 + $0xa0] sm:$0xff]
  %v36 = vld [vmem:[%s0 + $0xa8] sm:$0xff]
  %v37 = vld [vmem:[%s0 + $0xb0] sm:$0xff]
  %v38 = vld [vmem:[%s0 + $0xb8] sm:$0xff]
  %v39 = vld [vmem:[%s0 + $0xc0] sm:$0xff]
  %v40 = vld [vmem:[%s0 + $0xc8] sm:$0xff]
  %v41 = vld [vmem:[%s0 + $0xd0] sm:$0xff]
  %v42 = vld [vmem:[%s0 + $0xd8] sm:$0xff]
  %v43 = vld [vmem:[%s0 + $0xe0] sm:$0xff]
  %v44 = vld [vmem:[%s0 + $0xe8] sm:$0xff]
  %v45 = vld [vmem:[%s0 + $0xf0] sm:$0xff]
  %v46 = vld [vmem:[%s0 + $0xf8] sm:$0xff]
  %v47 = vld [vmem:[%s1] sm:$0x1]
  %v49 = vlaneseq
  %v50 = vshrl.u32 %v49, 7
  %v51 = vsub.s32 0, %v50
  %v52 = vrot.slane %v47, %v51
  %v54 = vmul.f32 %v15, %v52
  %v55 = vmul.f32 %v16, %v52
  %v56 = vmul.f32 %v17, %v52
  %v57 = vmul.f32 %v18, %v52
  %v58 = vmul.f32 %v19, %v52
  %v59 = vmul.f32 %v20, %v52
  %v60 = vmul.f32 %v21, %v52
  %v61 = vmul.f32 %v22, %v52
  %v62 = vmul.f32 %v23, %v52
  %v63 = vmul.f32 %v24, %v52
  %v64 = vmul.f32 %v25, %v52
  %v65 = vmul.f32 %v26, %v52
  %v66 = vmul.f32 %v27, %v52
  %v67 = vmul.f32 %v28, %v52
  %v68 = vmul.f32 %v29, %v52
  %v69 = vmul.f32 %v30, %v52
  %v70 = vmul.f32 %v31, %v52
  %v71 = vmul.f32 %v32, %v52
  %v72 = vmul.f32 %v33, %v52
  %v73 = vmul.f32 %v34, %v52
  %v74 = vmul.f32 %v35, %v52
  %v75 = vmul.f32 %v36, %v52
  %v76 = vmul.f32 %v37, %v52
  %v77 = vmul.f32 %v38, %v52
  %v78 = vmul.f32 %v39, %v52
  %v79 = vmul.f32 %v40, %v52
  %v80 = vmul.f32 %v41, %v52
  %v81 = vmul.f32 %v42, %v52
  %v82 = vmul.f32 %v43, %v52
  %v83 = vmul.f32 %v44, %v52
  %v84 = vmul.f32 %v45, %v52
  %v85 = vmul.f32 %v46, %v52
  %vm86 = vcmask 261120
  %v87 = vsel %vm86, %v54, 0.0
  %88 = vadd.xlane.f32.xlu0 %v87
  %v89 = vpop.xlane.xlu0 %88
  %v90 = vsel %vm86, %v55, 0.0
  %91 = vadd.xlane.f32.xlu0 %v90
  %v92 = vpop.xlane.xlu0 %91
  %v93 = vsel %vm86, %v56, 0.0
  %94 = vadd.xlane.f32.xlu0 %v93
  %v95 = vpop.xlane.xlu0 %94
  %v96 = vsel %vm86, %v57, 0.0
  %97 = vadd.xlane.f32.xlu0 %v96
  %v98 = vpop.xlane.xlu0 %97
  %v99 = vsel %vm86, %v58, 0.0
  %100 = vadd.xlane.f32.xlu0 %v99
  %v101 = vpop.xlane.xlu0 %100
  %v102 = vsel %vm86, %v59, 0.0
  %103 = vadd.xlane.f32.xlu0 %v102
  %v104 = vpop.xlane.xlu0 %103
  %v105 = vsel %vm86, %v60, 0.0
  %106 = vadd.xlane.f32.xlu0 %v105
  %v107 = vpop.xlane.xlu0 %106
  %v108 = vsel %vm86, %v61, 0.0
  %109 = vadd.xlane.f32.xlu0 %v108
  %v110 = vpop.xlane.xlu0 %109
  %v111 = vsel %vm86, %v62, 0.0
  %112 = vadd.xlane.f32.xlu0 %v111
  %v113 = vpop.xlane.xlu0 %112
  %v114 = vsel %vm86, %v63, 0.0
  %115 = vadd.xlane.f32.xlu0 %v114
  %v116 = vpop.xlane.xlu0 %115
  %v117 = vsel %vm86, %v64, 0.0
  %118 = vadd.xlane.f32.xlu0 %v117
  %v119 = vpop.xlane.xlu0 %118
  %v120 = vsel %vm86, %v65, 0.0
  %121 = vadd.xlane.f32.xlu0 %v120
  %v122 = vpop.xlane.xlu0 %121
  %v123 = vsel %vm86, %v66, 0.0
  %124 = vadd.xlane.f32.xlu0 %v123
  %v125 = vpop.xlane.xlu0 %124
  %v126 = vsel %vm86, %v67, 0.0
  %127 = vadd.xlane.f32.xlu0 %v126
  %v128 = vpop.xlane.xlu0 %127
  %v129 = vsel %vm86, %v68, 0.0
  %130 = vadd.xlane.f32.xlu0 %v129
  %v131 = vpop.xlane.xlu0 %130
  %v132 = vsel %vm86, %v69, 0.0
  %133 = vadd.xlane.f32.xlu0 %v132
  %v134 = vpop.xlane.xlu0 %133
  %v135 = vsel %vm86, %v70, 0.0
  %136 = vadd.xlane.f32.xlu0 %v135
  %v137 = vpop.xlane.xlu0 %136
  %v138 = vsel %vm86, %v71, 0.0
  %139 = vadd.xlane.f32.xlu0 %v138
  %v140 = vpop.xlane.xlu0 %139
  %v141 = vsel %vm86, %v72, 0.0
  %142 = vadd.xlane.f32.xlu0 %v141
  %v143 = vpop.xlane.xlu0 %142
  %v144 = vsel %vm86, %v73, 0.0
  %145 = vadd.xlane.f32.xlu0 %v144
  %v146 = vpop.xlane.xlu0 %145
  %v147 = vsel %vm86, %v74, 0.0
  %148 = vadd.xlane.f32.xlu0 %v147
  %v149 = vpop.xlane.xlu0 %148
  %v150 = vsel %vm86, %v75, 0.0
  %151 = vadd.xlane.f32.xlu0 %v150
  %v152 = vpop.xlane.xlu0 %151
  %v153 = vsel %vm86, %v76, 0.0
  %154 = vadd.xlane.f32.xlu0 %v153
  %v155 = vpop.xlane.xlu0 %154
  %v156 = vsel %vm86, %v77, 0.0
  %157 = vadd.xlane.f32.xlu0 %v156
  %v158 = vpop.xlane.xlu0 %157
  %v159 = vsel %vm86, %v78, 0.0
  %160 = vadd.xlane.f32.xlu0 %v159
  %v161 = vpop.xlane.xlu0 %160
  %v162 = vsel %vm86, %v79, 0.0
  %163 = vadd.xlane.f32.xlu0 %v162
  %v164 = vpop.xlane.xlu0 %163
  %v165 = vsel %vm86, %v80, 0.0
  %166 = vadd.xlane.f32.xlu0 %v165
  %v167 = vpop.xlane.xlu0 %166
  %v168 = vsel %vm86, %v81, 0.0
  %169 = vadd.xlane.f32.xlu0 %v168
  %v170 = vpop.xlane.xlu0 %169
  %v171 = vsel %vm86, %v82, 0.0
  %172 = vadd.xlane.f32.xlu0 %v171
  %v173 = vpop.xlane.xlu0 %172
  %v174 = vsel %vm86, %v83, 0.0
  %175 = vadd.xlane.f32.xlu0 %v174
  %v176 = vpop.xlane.xlu0 %175
  %v177 = vsel %vm86, %v84, 0.0
  %178 = vadd.xlane.f32.xlu0 %v177
  %v179 = vpop.xlane.xlu0 %178
  %v180 = vsel %vm86, %v85, 0.0
  %181 = vadd.xlane.f32.xlu0 %v180
  %v182 = vpop.xlane.xlu0 %181
  %215 = vrot.lane.b32.xlu0 %v54, 96
  %v216 = vpop.permute.xlu0 %215
  %217 = vrot.lane.b32.xlu0 %v55, 96
  %v218 = vpop.permute.xlu0 %217
  %219 = vrot.lane.b32.xlu0 %v56, 96
  %v220 = vpop.permute.xlu0 %219
  %221 = vrot.lane.b32.xlu0 %v57, 96
  %v222 = vpop.permute.xlu0 %221
  %223 = vrot.lane.b32.xlu0 %v58, 96
  %v224 = vpop.permute.xlu0 %223
  %225 = vrot.lane.b32.xlu0 %v59, 96
  %v226 = vpop.permute.xlu0 %225
  %227 = vrot.lane.b32.xlu0 %v60, 96
  %v228 = vpop.permute.xlu0 %227
  %229 = vrot.lane.b32.xlu0 %v61, 96
  %v230 = vpop.permute.xlu0 %229
  %231 = vrot.lane.b32.xlu0 %v62, 96
  %v232 = vpop.permute.xlu0 %231
  %233 = vrot.lane.b32.xlu0 %v63, 96
  %v234 = vpop.permute.xlu0 %233
  %235 = vrot.lane.b32.xlu0 %v64, 96
  %v236 = vpop.permute.xlu0 %235
  %237 = vrot.lane.b32.xlu0 %v65, 96
  %v238 = vpop.permute.xlu0 %237
  %239 = vrot.lane.b32.xlu0 %v66, 96
  %v240 = vpop.permute.xlu0 %239
  %241 = vrot.lane.b32.xlu0 %v67, 96
  %v242 = vpop.permute.xlu0 %241
  %243 = vrot.lane.b32.xlu0 %v68, 96
  %v244 = vpop.permute.xlu0 %243
  %245 = vrot.lane.b32.xlu0 %v69, 96
  %v246 = vpop.permute.xlu0 %245
  %247 = vrot.lane.b32.xlu0 %v70, 96
  %v248 = vpop.permute.xlu0 %247
  %249 = vrot.lane.b32.xlu0 %v71, 96
  %v250 = vpop.permute.xlu0 %249
  %251 = vrot.lane.b32.xlu0 %v72, 96
  %v252 = vpop.permute.xlu0 %251
  %253 = vrot.lane.b32.xlu0 %v73, 96
  %v254 = vpop.permute.xlu0 %253
  %255 = vrot.lane.b32.xlu0 %v74, 96
  %v256 = vpop.permute.xlu0 %255
  %257 = vrot.lane.b32.xlu0 %v75, 96
  %v258 = vpop.permute.xlu0 %257
  %259 = vrot.lane.b32.xlu0 %v76, 96
  %v260 = vpop.permute.xlu0 %259
  %261 = vrot.lane.b32.xlu0 %v77, 96
  %v262 = vpop.permute.xlu0 %261
  %263 = vrot.lane.b32.xlu0 %v78, 96
  %v264 = vpop.permute.xlu0 %263
  %265 = vrot.lane.b32.xlu0 %v79, 96
  %v266 = vpop.permute.xlu0 %265
  %267 = vrot.lane.b32.xlu0 %v80, 96
  %v268 = vpop.permute.xlu0 %267
  %269 = vrot.lane.b32.xlu0 %v81, 96
  %v270 = vpop.permute.xlu0 %269
  %271 = vrot.lane.b32.xlu0 %v82, 96
  %v272 = vpop.permute.xlu0 %271
  %273 = vrot.lane.b32.xlu0 %v83, 96
  %v274 = vpop.permute.xlu0 %273
  %275 = vrot.lane.b32.xlu0 %v84, 96
  %v276 = vpop.permute.xlu0 %275
  %277 = vrot.lane.b32.xlu0 %v85, 96
  %v278 = vpop.permute.xlu0 %277
  %v311 = vsel %vm86, %v216, 0.0
  %312 = vadd.xlane.f32.xlu0 %v311
  %v313 = vpop.xlane.xlu0 %312
  %v314 = vsel %vm86, %v218, 0.0
  %315 = vadd.xlane.f32.xlu0 %v314
  %v316 = vpop.xlane.xlu0 %315
  %v317 = vsel %vm86, %v220, 0.0
  %318 = vadd.xlane.f32.xlu0 %v317
  %v319 = vpop.xlane.xlu0 %318
  %v320 = vsel %vm86, %v222, 0.0
  %321 = vadd.xlane.f32.xlu0 %v320
  %v322 = vpop.xlane.xlu0 %321
  %v323 = vsel %vm86, %v224, 0.0
  %324 = vadd.xlane.f32.xlu0 %v323
  %v325 = vpop.xlane.xlu0 %324
  %v326 = vsel %vm86, %v226, 0.0
  %327 = vadd.xlane.f32.xlu0 %v326
  %v328 = vpop.xlane.xlu0 %327
  %v329 = vsel %vm86, %v228, 0.0
  %330 = vadd.xlane.f32.xlu0 %v329
  %v331 = vpop.xlane.xlu0 %330
  %v332 = vsel %vm86, %v230, 0.0
  %333 = vadd.xlane.f32.xlu0 %v332
  %v334 = vpop.xlane.xlu0 %333
  %v335 = vsel %vm86, %v232, 0.0
  %336 = vadd.xlane.f32.xlu0 %v335
  %v337 = vpop.xlane.xlu0 %336
  %v338 = vsel %vm86, %v234, 0.0
  %339 = vadd.xlane.f32.xlu0 %v338
  %v340 = vpop.xlane.xlu0 %339
  %v341 = vsel %vm86, %v236, 0.0
  %342 = vadd.xlane.f32.xlu0 %v341
  %v343 = vpop.xlane.xlu0 %342
  %v344 = vsel %vm86, %v238, 0.0
  %345 = vadd.xlane.f32.xlu0 %v344
  %v346 = vpop.xlane.xlu0 %345
  %v347 = vsel %vm86, %v240, 0.0
  %348 = vadd.xlane.f32.xlu0 %v347
  %v349 = vpop.xlane.xlu0 %348
  %v350 = vsel %vm86, %v242, 0.0
  %351 = vadd.xlane.f32.xlu0 %v350
  %v352 = vpop.xlane.xlu0 %351
  %v353 = vsel %vm86, %v244, 0.0
  %354 = vadd.xlane.f32.xlu0 %v353
  %v355 = vpop.xlane.xlu0 %354
  %v356 = vsel %vm86, %v246, 0.0
  %357 = vadd.xlane.f32.xlu0 %v356
  %v358 = vpop.xlane.xlu0 %357
  %v359 = vsel %vm86, %v248, 0.0
  %360 = vadd.xlane.f32.xlu0 %v359
  %v361 = vpop.xlane.xlu0 %360
  %v362 = vsel %vm86, %v250, 0.0
  %363 = vadd.xlane.f32.xlu0 %v362
  %v364 = vpop.xlane.xlu0 %363
  %v365 = vsel %vm86, %v252, 0.0
  %366 = vadd.xlane.f32.xlu0 %v365
  %v367 = vpop.xlane.xlu0 %366
  %v368 = vsel %vm86, %v254, 0.0
  %369 = vadd.xlane.f32.xlu0 %v368
  %v370 = vpop.xlane.xlu0 %369
  %v371 = vsel %vm86, %v256, 0.0
  %372 = vadd.xlane.f32.xlu0 %v371
  %v373 = vpop.xlane.xlu0 %372
  %v374 = vsel %vm86, %v258, 0.0
  %375 = vadd.xlane.f32.xlu0 %v374
  %v376 = vpop.xlane.xlu0 %375
  %v377 = vsel %vm86, %v260, 0.0
  %378 = vadd.xlane.f32.xlu0 %v377
  %v379 = vpop.xlane.xlu0 %378
  %v380 = vsel %vm86, %v262, 0.0
  %381 = vadd.xlane.f32.xlu0 %v380
  %v382 = vpop.xlane.xlu0 %381
  %v383 = vsel %vm86, %v264, 0.0
  %384 = vadd.xlane.f32.xlu0 %v383
  %v385 = vpop.xlane.xlu0 %384
  %v386 = vsel %vm86, %v266, 0.0
  %387 = vadd.xlane.f32.xlu0 %v386
  %v388 = vpop.xlane.xlu0 %387
  %v389 = vsel %vm86, %v268, 0.0
  %390 = vadd.xlane.f32.xlu0 %v389
  %v391 = vpop.xlane.xlu0 %390
  %v392 = vsel %vm86, %v270, 0.0
  %393 = vadd.xlane.f32.xlu0 %v392
  %v394 = vpop.xlane.xlu0 %393
  %v395 = vsel %vm86, %v272, 0.0
  %396 = vadd.xlane.f32.xlu0 %v395
  %v397 = vpop.xlane.xlu0 %396
  %v398 = vsel %vm86, %v274, 0.0
  %399 = vadd.xlane.f32.xlu0 %v398
  %v400 = vpop.xlane.xlu0 %399
  %v401 = vsel %vm86, %v276, 0.0
  %402 = vadd.xlane.f32.xlu0 %v401
  %v403 = vpop.xlane.xlu0 %402
  %v404 = vsel %vm86, %v278, 0.0
  %405 = vadd.xlane.f32.xlu0 %v404
  %v406 = vpop.xlane.xlu0 %405
  %407 = vrot.lane.b32.xlu0 %v54, 64
  %v408 = vpop.permute.xlu0 %407
  %409 = vrot.lane.b32.xlu0 %v55, 64
  %v410 = vpop.permute.xlu0 %409
  %411 = vrot.lane.b32.xlu0 %v56, 64
  %v412 = vpop.permute.xlu0 %411
  %413 = vrot.lane.b32.xlu0 %v57, 64
  %v414 = vpop.permute.xlu0 %413
  %415 = vrot.lane.b32.xlu0 %v58, 64
  %v416 = vpop.permute.xlu0 %415
  %417 = vrot.lane.b32.xlu0 %v59, 64
  %v418 = vpop.permute.xlu0 %417
  %419 = vrot.lane.b32.xlu0 %v60, 64
  %v420 = vpop.permute.xlu0 %419
  %421 = vrot.lane.b32.xlu0 %v61, 64
  %v422 = vpop.permute.xlu0 %421
  %423 = vrot.lane.b32.xlu0 %v62, 64
  %v424 = vpop.permute.xlu0 %423
  %425 = vrot.lane.b32.xlu0 %v63, 64
  %v426 = vpop.permute.xlu0 %425
  %427 = vrot.lane.b32.xlu0 %v64, 64
  %v428 = vpop.permute.xlu0 %427
  %429 = vrot.lane.b32.xlu0 %v65, 64
  %v430 = vpop.permute.xlu0 %429
  %431 = vrot.lane.b32.xlu0 %v66, 64
  %v432 = vpop.permute.xlu0 %431
  %433 = vrot.lane.b32.xlu0 %v67, 64
  %v434 = vpop.permute.xlu0 %433
  %435 = vrot.lane.b32.xlu0 %v68, 64
  %v436 = vpop.permute.xlu0 %435
  %437 = vrot.lane.b32.xlu0 %v69, 64
  %v438 = vpop.permute.xlu0 %437
  %439 = vrot.lane.b32.xlu0 %v70, 64
  %v440 = vpop.permute.xlu0 %439
  %441 = vrot.lane.b32.xlu0 %v71, 64
  %v442 = vpop.permute.xlu0 %441
  %443 = vrot.lane.b32.xlu0 %v72, 64
  %v444 = vpop.permute.xlu0 %443
  %445 = vrot.lane.b32.xlu0 %v73, 64
  %v446 = vpop.permute.xlu0 %445
  %447 = vrot.lane.b32.xlu0 %v74, 64
  %v448 = vpop.permute.xlu0 %447
  %449 = vrot.lane.b32.xlu0 %v75, 64
  %v450 = vpop.permute.xlu0 %449
  %451 = vrot.lane.b32.xlu0 %v76, 64
  %v452 = vpop.permute.xlu0 %451
  %453 = vrot.lane.b32.xlu0 %v77, 64
  %v454 = vpop.permute.xlu0 %453
  %455 = vrot.lane.b32.xlu0 %v78, 64
  %v456 = vpop.permute.xlu0 %455
  %457 = vrot.lane.b32.xlu0 %v79, 64
  %v458 = vpop.permute.xlu0 %457
  %459 = vrot.lane.b32.xlu0 %v80, 64
  %v460 = vpop.permute.xlu0 %459
  %461 = vrot.lane.b32.xlu0 %v81, 64
  %v462 = vpop.permute.xlu0 %461
  %463 = vrot.lane.b32.xlu0 %v82, 64
  %v464 = vpop.permute.xlu0 %463
  %465 = vrot.lane.b32.xlu0 %v83, 64
  %v466 = vpop.permute.xlu0 %465
  %467 = vrot.lane.b32.xlu0 %v84, 64
  %v468 = vpop.permute.xlu0 %467
  %469 = vrot.lane.b32.xlu0 %v85, 64
  %v470 = vpop.permute.xlu0 %469
  %v503 = vsel %vm86, %v408, 0.0
  %504 = vadd.xlane.f32.xlu0 %v503
  %v505 = vpop.xlane.xlu0 %504
  %v506 = vsel %vm86, %v410, 0.0
  %507 = vadd.xlane.f32.xlu0 %v506
  %v508 = vpop.xlane.xlu0 %507
  %v509 = vsel %vm86, %v412, 0.0
  %510 = vadd.xlane.f32.xlu0 %v509
  %v511 = vpop.xlane.xlu0 %510
  %v512 = vsel %vm86, %v414, 0.0
  %513 = vadd.xlane.f32.xlu0 %v512
  %v514 = vpop.xlane.xlu0 %513
  %v515 = vsel %vm86, %v416, 0.0
  %516 = vadd.xlane.f32.xlu0 %v515
  %v517 = vpop.xlane.xlu0 %516
  %v518 = vsel %vm86, %v418, 0.0
  %519 = vadd.xlane.f32.xlu0 %v518
  %v520 = vpop.xlane.xlu0 %519
  %v521 = vsel %vm86, %v420, 0.0
  %522 = vadd.xlane.f32.xlu0 %v521
  %v523 = vpop.xlane.xlu0 %522
  %v524 = vsel %vm86, %v422, 0.0
  %525 = vadd.xlane.f32.xlu0 %v524
  %v526 = vpop.xlane.xlu0 %525
  %v527 = vsel %vm86, %v424, 0.0
  %528 = vadd.xlane.f32.xlu0 %v527
  %v529 = vpop.xlane.xlu0 %528
  %v530 = vsel %vm86, %v426, 0.0
  %531 = vadd.xlane.f32.xlu0 %v530
  %v532 = vpop.xlane.xlu0 %531
  %v533 = vsel %vm86, %v428, 0.0
  %534 = vadd.xlane.f32.xlu0 %v533
  %v535 = vpop.xlane.xlu0 %534
  %v536 = vsel %vm86, %v430, 0.0
  %537 = vadd.xlane.f32.xlu0 %v536
  %v538 = vpop.xlane.xlu0 %537
  %v539 = vsel %vm86, %v432, 0.0
  %540 = vadd.xlane.f32.xlu0 %v539
  %v541 = vpop.xlane.xlu0 %540
  %v542 = vsel %vm86, %v434, 0.0
  %543 = vadd.xlane.f32.xlu0 %v542
  %v544 = vpop.xlane.xlu0 %543
  %v545 = vsel %vm86, %v436, 0.0
  %546 = vadd.xlane.f32.xlu0 %v545
  %v547 = vpop.xlane.xlu0 %546
  %v548 = vsel %vm86, %v438, 0.0
  %549 = vadd.xlane.f32.xlu0 %v548
  %v550 = vpop.xlane.xlu0 %549
  %v551 = vsel %vm86, %v440, 0.0
  %552 = vadd.xlane.f32.xlu0 %v551
  %v553 = vpop.xlane.xlu0 %552
  %v554 = vsel %vm86, %v442, 0.0
  %555 = vadd.xlane.f32.xlu0 %v554
  %v556 = vpop.xlane.xlu0 %555
  %v557 = vsel %vm86, %v444, 0.0
  %558 = vadd.xlane.f32.xlu0 %v557
  %v559 = vpop.xlane.xlu0 %558
  %v560 = vsel %vm86, %v446, 0.0
  %561 = vadd.xlane.f32.xlu0 %v560
  %v562 = vpop.xlane.xlu0 %561
  %v563 = vsel %vm86, %v448, 0.0
  %564 = vadd.xlane.f32.xlu0 %v563
  %v565 = vpop.xlane.xlu0 %564
  %v566 = vsel %vm86, %v450, 0.0
  %567 = vadd.xlane.f32.xlu0 %v566
  %v568 = vpop.xlane.xlu0 %567
  %v569 = vsel %vm86, %v452, 0.0
  %570 = vadd.xlane.f32.xlu0 %v569
  %v571 = vpop.xlane.xlu0 %570
  %v572 = vsel %vm86, %v454, 0.0
  %573 = vadd.xlane.f32.xlu0 %v572
  %v574 = vpop.xlane.xlu0 %573
  %v575 = vsel %vm86, %v456, 0.0
  %576 = vadd.xlane.f32.xlu0 %v575
  %v577 = vpop.xlane.xlu0 %576
  %v578 = vsel %vm86, %v458, 0.0
  %579 = vadd.xlane.f32.xlu0 %v578
  %v580 = vpop.xlane.xlu0 %579
  %v581 = vsel %vm86, %v460, 0.0
  %582 = vadd.xlane.f32.xlu0 %v581
  %v583 = vpop.xlane.xlu0 %582
  %v584 = vsel %vm86, %v462, 0.0
  %585 = vadd.xlane.f32.xlu0 %v584
  %v586 = vpop.xlane.xlu0 %585
  %v587 = vsel %vm86, %v464, 0.0
  %588 = vadd.xlane.f32.xlu0 %v587
  %v589 = vpop.xlane.xlu0 %588
  %v590 = vsel %vm86, %v466, 0.0
  %591 = vadd.xlane.f32.xlu0 %v590
  %v592 = vpop.xlane.xlu0 %591
  %v593 = vsel %vm86, %v468, 0.0
  %594 = vadd.xlane.f32.xlu0 %v593
  %v595 = vpop.xlane.xlu0 %594
  %v596 = vsel %vm86, %v470, 0.0
  %597 = vadd.xlane.f32.xlu0 %v596
  %v598 = vpop.xlane.xlu0 %597
  %599 = vrot.lane.b32.xlu0 %v54, 32
  %v600 = vpop.permute.xlu0 %599
  %601 = vrot.lane.b32.xlu0 %v55, 32
  %v602 = vpop.permute.xlu0 %601
  %603 = vrot.lane.b32.xlu0 %v56, 32
  %v604 = vpop.permute.xlu0 %603
  %605 = vrot.lane.b32.xlu0 %v57, 32
  %v606 = vpop.permute.xlu0 %605
  %607 = vrot.lane.b32.xlu0 %v58, 32
  %v608 = vpop.permute.xlu0 %607
  %609 = vrot.lane.b32.xlu0 %v59, 32
  %v610 = vpop.permute.xlu0 %609
  %611 = vrot.lane.b32.xlu0 %v60, 32
  %v612 = vpop.permute.xlu0 %611
  %613 = vrot.lane.b32.xlu0 %v61, 32
  %v614 = vpop.permute.xlu0 %613
  %615 = vrot.lane.b32.xlu0 %v62, 32
  %v616 = vpop.permute.xlu0 %615
  %617 = vrot.lane.b32.xlu0 %v63, 32
  %v618 = vpop.permute.xlu0 %617
  %619 = vrot.lane.b32.xlu0 %v64, 32
  %v620 = vpop.permute.xlu0 %619
  %621 = vrot.lane.b32.xlu0 %v65, 32
  %v622 = vpop.permute.xlu0 %621
  %623 = vrot.lane.b32.xlu0 %v66, 32
  %v624 = vpop.permute.xlu0 %623
  %625 = vrot.lane.b32.xlu0 %v67, 32
  %v626 = vpop.permute.xlu0 %625
  %627 = vrot.lane.b32.xlu0 %v68, 32
  %v628 = vpop.permute.xlu0 %627
  %629 = vrot.lane.b32.xlu0 %v69, 32
  %v630 = vpop.permute.xlu0 %629
  %631 = vrot.lane.b32.xlu0 %v70, 32
  %v632 = vpop.permute.xlu0 %631
  %633 = vrot.lane.b32.xlu0 %v71, 32
  %v634 = vpop.permute.xlu0 %633
  %635 = vrot.lane.b32.xlu0 %v72, 32
  %v636 = vpop.permute.xlu0 %635
  %637 = vrot.lane.b32.xlu0 %v73, 32
  %v638 = vpop.permute.xlu0 %637
  %639 = vrot.lane.b32.xlu0 %v74, 32
  %v640 = vpop.permute.xlu0 %639
  %641 = vrot.lane.b32.xlu0 %v75, 32
  %v642 = vpop.permute.xlu0 %641
  %643 = vrot.lane.b32.xlu0 %v76, 32
  %v644 = vpop.permute.xlu0 %643
  %645 = vrot.lane.b32.xlu0 %v77, 32
  %v646 = vpop.permute.xlu0 %645
  %647 = vrot.lane.b32.xlu0 %v78, 32
  %v648 = vpop.permute.xlu0 %647
  %649 = vrot.lane.b32.xlu0 %v79, 32
  %v650 = vpop.permute.xlu0 %649
  %651 = vrot.lane.b32.xlu0 %v80, 32
  %v652 = vpop.permute.xlu0 %651
  %653 = vrot.lane.b32.xlu0 %v81, 32
  %v654 = vpop.permute.xlu0 %653
  %655 = vrot.lane.b32.xlu0 %v82, 32
  %v656 = vpop.permute.xlu0 %655
  %657 = vrot.lane.b32.xlu0 %v83, 32
  %v658 = vpop.permute.xlu0 %657
  %659 = vrot.lane.b32.xlu0 %v84, 32
  %v660 = vpop.permute.xlu0 %659
  %661 = vrot.lane.b32.xlu0 %v85, 32
  %v662 = vpop.permute.xlu0 %661
  %v695 = vsel %vm86, %v600, 0.0
  %696 = vadd.xlane.f32.xlu0 %v695
  %v697 = vpop.xlane.xlu0 %696
  %v698 = vsel %vm86, %v602, 0.0
  %699 = vadd.xlane.f32.xlu0 %v698
  %v700 = vpop.xlane.xlu0 %699
  %v701 = vsel %vm86, %v604, 0.0
  %702 = vadd.xlane.f32.xlu0 %v701
  %v703 = vpop.xlane.xlu0 %702
  %v704 = vsel %vm86, %v606, 0.0
  %705 = vadd.xlane.f32.xlu0 %v704
  %v706 = vpop.xlane.xlu0 %705
  %v707 = vsel %vm86, %v608, 0.0
  %708 = vadd.xlane.f32.xlu0 %v707
  %v709 = vpop.xlane.xlu0 %708
  %v710 = vsel %vm86, %v610, 0.0
  %711 = vadd.xlane.f32.xlu0 %v710
  %v712 = vpop.xlane.xlu0 %711
  %v713 = vsel %vm86, %v612, 0.0
  %714 = vadd.xlane.f32.xlu0 %v713
  %v715 = vpop.xlane.xlu0 %714
  %v716 = vsel %vm86, %v614, 0.0
  %717 = vadd.xlane.f32.xlu0 %v716
  %v718 = vpop.xlane.xlu0 %717
  %v719 = vsel %vm86, %v616, 0.0
  %720 = vadd.xlane.f32.xlu0 %v719
  %v721 = vpop.xlane.xlu0 %720
  %v722 = vsel %vm86, %v618, 0.0
  %723 = vadd.xlane.f32.xlu0 %v722
  %v724 = vpop.xlane.xlu0 %723
  %v725 = vsel %vm86, %v620, 0.0
  %726 = vadd.xlane.f32.xlu0 %v725
  %v727 = vpop.xlane.xlu0 %726
  %v728 = vsel %vm86, %v622, 0.0
  %729 = vadd.xlane.f32.xlu0 %v728
  %v730 = vpop.xlane.xlu0 %729
  %v731 = vsel %vm86, %v624, 0.0
  %732 = vadd.xlane.f32.xlu0 %v731
  %v733 = vpop.xlane.xlu0 %732
  %v734 = vsel %vm86, %v626, 0.0
  %735 = vadd.xlane.f32.xlu0 %v734
  %v736 = vpop.xlane.xlu0 %735
  %v737 = vsel %vm86, %v628, 0.0
  %738 = vadd.xlane.f32.xlu0 %v737
  %v739 = vpop.xlane.xlu0 %738
  %v740 = vsel %vm86, %v630, 0.0
  %741 = vadd.xlane.f32.xlu0 %v740
  %v742 = vpop.xlane.xlu0 %741
  %v743 = vsel %vm86, %v632, 0.0
  %744 = vadd.xlane.f32.xlu0 %v743
  %v745 = vpop.xlane.xlu0 %744
  %v746 = vsel %vm86, %v634, 0.0
  %747 = vadd.xlane.f32.xlu0 %v746
  %v748 = vpop.xlane.xlu0 %747
  %v749 = vsel %vm86, %v636, 0.0
  %750 = vadd.xlane.f32.xlu0 %v749
  %v751 = vpop.xlane.xlu0 %750
  %v752 = vsel %vm86, %v638, 0.0
  %753 = vadd.xlane.f32.xlu0 %v752
  %v754 = vpop.xlane.xlu0 %753
  %v755 = vsel %vm86, %v640, 0.0
  %756 = vadd.xlane.f32.xlu0 %v755
  %v757 = vpop.xlane.xlu0 %756
  %v758 = vsel %vm86, %v642, 0.0
  %759 = vadd.xlane.f32.xlu0 %v758
  %v760 = vpop.xlane.xlu0 %759
  %v761 = vsel %vm86, %v644, 0.0
  %762 = vadd.xlane.f32.xlu0 %v761
  %v763 = vpop.xlane.xlu0 %762
  %v764 = vsel %vm86, %v646, 0.0
  %765 = vadd.xlane.f32.xlu0 %v764
  %v766 = vpop.xlane.xlu0 %765
  %v767 = vsel %vm86, %v648, 0.0
  %768 = vadd.xlane.f32.xlu0 %v767
  %v769 = vpop.xlane.xlu0 %768
  %v770 = vsel %vm86, %v650, 0.0
  %771 = vadd.xlane.f32.xlu0 %v770
  %v772 = vpop.xlane.xlu0 %771
  %v773 = vsel %vm86, %v652, 0.0
  %774 = vadd.xlane.f32.xlu0 %v773
  %v775 = vpop.xlane.xlu0 %774
  %v776 = vsel %vm86, %v654, 0.0
  %777 = vadd.xlane.f32.xlu0 %v776
  %v778 = vpop.xlane.xlu0 %777
  %v779 = vsel %vm86, %v656, 0.0
  %780 = vadd.xlane.f32.xlu0 %v779
  %v781 = vpop.xlane.xlu0 %780
  %v782 = vsel %vm86, %v658, 0.0
  %783 = vadd.xlane.f32.xlu0 %v782
  %v784 = vpop.xlane.xlu0 %783
  %v785 = vsel %vm86, %v660, 0.0
  %786 = vadd.xlane.f32.xlu0 %v785
  %v787 = vpop.xlane.xlu0 %786
  %v788 = vsel %vm86, %v662, 0.0
  %789 = vadd.xlane.f32.xlu0 %v788
  %v790 = vpop.xlane.xlu0 %789
  %vm791 = vcmask 7168
  %v792 = vsel %vm791, %v89, %v313
  %v793 = vsel %vm791, %v92, %v316
  %v794 = vsel %vm791, %v95, %v319
  %v795 = vsel %vm791, %v98, %v322
  %v796 = vsel %vm791, %v101, %v325
  %v797 = vsel %vm791, %v104, %v328
  %v798 = vsel %vm791, %v107, %v331
  %v799 = vsel %vm791, %v110, %v334
  %v800 = vsel %vm791, %v113, %v337
  %v801 = vsel %vm791, %v116, %v340
  %v802 = vsel %vm791, %v119, %v343
  %v803 = vsel %vm791, %v122, %v346
  %v804 = vsel %vm791, %v125, %v349
  %v805 = vsel %vm791, %v128, %v352
  %v806 = vsel %vm791, %v131, %v355
  %v807 = vsel %vm791, %v134, %v358
  %v808 = vsel %vm791, %v137, %v361
  %v809 = vsel %vm791, %v140, %v364
  %v810 = vsel %vm791, %v143, %v367
  %v811 = vsel %vm791, %v146, %v370
  %v812 = vsel %vm791, %v149, %v373
  %v813 = vsel %vm791, %v152, %v376
  %v814 = vsel %vm791, %v155, %v379
  %v815 = vsel %vm791, %v158, %v382
  %v816 = vsel %vm791, %v161, %v385
  %v817 = vsel %vm791, %v164, %v388
  %v818 = vsel %vm791, %v167, %v391
  %v819 = vsel %vm791, %v170, %v394
  %v820 = vsel %vm791, %v173, %v397
  %v821 = vsel %vm791, %v176, %v400
  %v822 = vsel %vm791, %v179, %v403
  %v823 = vsel %vm791, %v182, %v406
  %vm824 = vcmask 15360
  %v825 = vsel %vm824, %v792, %v505
  %v826 = vsel %vm824, %v793, %v508
  %v827 = vsel %vm824, %v794, %v511
  %v828 = vsel %vm824, %v795, %v514
  %v829 = vsel %vm824, %v796, %v517
  %v830 = vsel %vm824, %v797, %v520
  %v831 = vsel %vm824, %v798, %v523
  %v832 = vsel %vm824, %v799, %v526
  %v833 = vsel %vm824, %v800, %v529
  %v834 = vsel %vm824, %v801, %v532
  %v835 = vsel %vm824, %v802, %v535
  %v836 = vsel %vm824, %v803, %v538
  %v837 = vsel %vm824, %v804, %v541
  %v838 = vsel %vm824, %v805, %v544
  %v839 = vsel %vm824, %v806, %v547
  %v840 = vsel %vm824, %v807, %v550
  %v841 = vsel %vm824, %v808, %v553
  %v842 = vsel %vm824, %v809, %v556
  %v843 = vsel %vm824, %v810, %v559
  %v844 = vsel %vm824, %v811, %v562
  %v845 = vsel %vm824, %v812, %v565
  %v846 = vsel %vm824, %v813, %v568
  %v847 = vsel %vm824, %v814, %v571
  %v848 = vsel %vm824, %v815, %v574
  %v849 = vsel %vm824, %v816, %v577
  %v850 = vsel %vm824, %v817, %v580
  %v851 = vsel %vm824, %v818, %v583
  %v852 = vsel %vm824, %v819, %v586
  %v853 = vsel %vm824, %v820, %v589
  %v854 = vsel %vm824, %v821, %v592
  %v855 = vsel %vm824, %v822, %v595
  %v856 = vsel %vm824, %v823, %v598
  %vm857 = vcmask 23552
  %v858 = vsel %vm857, %v825, %v697
  %v859 = vsel %vm857, %v826, %v700
  %v860 = vsel %vm857, %v827, %v703
  %v861 = vsel %vm857, %v828, %v706
  %v862 = vsel %vm857, %v829, %v709
  %v863 = vsel %vm857, %v830, %v712
  %v864 = vsel %vm857, %v831, %v715
  %v865 = vsel %vm857, %v832, %v718
  %v866 = vsel %vm857, %v833, %v721
  %v867 = vsel %vm857, %v834, %v724
  %v868 = vsel %vm857, %v835, %v727
  %v869 = vsel %vm857, %v836, %v730
  %v870 = vsel %vm857, %v837, %v733
  %v871 = vsel %vm857, %v838, %v736
  %v872 = vsel %vm857, %v839, %v739
  %v873 = vsel %vm857, %v840, %v742
  %v874 = vsel %vm857, %v841, %v745
  %v875 = vsel %vm857, %v842, %v748
  %v876 = vsel %vm857, %v843, %v751
  %v877 = vsel %vm857, %v844, %v754
  %v878 = vsel %vm857, %v845, %v757
  %v879 = vsel %vm857, %v846, %v760
  %v880 = vsel %vm857, %v847, %v763
  %v881 = vsel %vm857, %v848, %v766
  %v882 = vsel %vm857, %v849, %v769
  %v883 = vsel %vm857, %v850, %v772
  %v884 = vsel %vm857, %v851, %v775
  %v885 = vsel %vm857, %v852, %v778
  %v886 = vsel %vm857, %v853, %v781
  %v887 = vsel %vm857, %v854, %v784
  %v888 = vsel %vm857, %v855, %v787
  %v889 = vsel %vm857, %v856, %v790
  %s890 = sld [smem:[#allocation2]]
  %v891 = vstv %s890
  %v892 = vadd.f32 %v858, %v891
  %v893 = vadd.f32 %v859, %v891
  %v894 = vadd.f32 %v860, %v891
  %v895 = vadd.f32 %v861, %v891
  %v896 = vadd.f32 %v862, %v891
  %v897 = vadd.f32 %v863, %v891
  %v898 = vadd.f32 %v864, %v891
  %v899 = vadd.f32 %v865, %v891
  %v900 = vadd.f32 %v866, %v891
  %v901 = vadd.f32 %v867, %v891
  %v902 = vadd.f32 %v868, %v891
  %v903 = vadd.f32 %v869, %v891
  %v904 = vadd.f32 %v870, %v891
  %v905 = vadd.f32 %v871, %v891
  %v906 = vadd.f32 %v872, %v891
  %v907 = vadd.f32 %v873, %v891
  %v908 = vadd.f32 %v874, %v891
  %v909 = vadd.f32 %v875, %v891
  %v910 = vadd.f32 %v876, %v891
  %v911 = vadd.f32 %v877, %v891
  %v912 = vadd.f32 %v878, %v891
  %v913 = vadd.f32 %v879, %v891
  %v914 = vadd.f32 %v880, %v891
  %v915 = vadd.f32 %v881, %v891
  %v916 = vadd.f32 %v882, %v891
  %v917 = vadd.f32 %v883, %v891
  %v918 = vadd.f32 %v884, %v891
  %v919 = vadd.f32 %v885, %v891
  %v920 = vadd.f32 %v886, %v891
  %v921 = vadd.f32 %v887, %v891
  %v922 = vadd.f32 %v888, %v891
  %v923 = vadd.f32 %v889, %v891
  %vm924 = vcmask 31744
  %925 = vst.msk [vmem:[%s3] sm:$0xff] %vm924, %v892
  %926 = vst.msk [vmem:[%s3 + $0x8] sm:$0xff] %vm924, %v893
  %927 = vst.msk [vmem:[%s3 + $0x10] sm:$0xff] %vm924, %v894
  %928 = vst.msk [vmem:[%s3 + $0x18] sm:$0xff] %vm924, %v895
  %929 = vst.msk [vmem:[%s3 + $0x20] sm:$0xff] %vm924, %v896
  %930 = vst.msk [vmem:[%s3 + $0x28] sm:$0xff] %vm924, %v897
  %931 = vst.msk [vmem:[%s3 + $0x30] sm:$0xff] %vm924, %v898
  %932 = vst.msk [vmem:[%s3 + $0x38] sm:$0xff] %vm924, %v899
  %933 = vst.msk [vmem:[%s3 + $0x40] sm:$0xff] %vm924, %v900
  %934 = vst.msk [vmem:[%s3 + $0x48] sm:$0xff] %vm924, %v901
  %935 = vst.msk [vmem:[%s3 + $0x50] sm:$0xff] %vm924, %v902
  %936 = vst.msk [vmem:[%s3 + $0x58] sm:$0xff] %vm924, %v903
  %937 = vst.msk [vmem:[%s3 + $0x60] sm:$0xff] %vm924, %v904
  %938 = vst.msk [vmem:[%s3 + $0x68] sm:$0xff] %vm924, %v905
  %939 = vst.msk [vmem:[%s3 + $0x70] sm:$0xff] %vm924, %v906
  %940 = vst.msk [vmem:[%s3 + $0x78] sm:$0xff] %vm924, %v907
  %941 = vst.msk [vmem:[%s3 + $0x80] sm:$0xff] %vm924, %v908
  %942 = vst.msk [vmem:[%s3 + $0x88] sm:$0xff] %vm924, %v909
  %943 = vst.msk [vmem:[%s3 + $0x90] sm:$0xff] %vm924, %v910
  %944 = vst.msk [vmem:[%s3 + $0x98] sm:$0xff] %vm924, %v911
  %945 = vst.msk [vmem:[%s3 + $0xa0] sm:$0xff] %vm924, %v912
  %946 = vst.msk [vmem:[%s3 + $0xa8] sm:$0xff] %vm924, %v913
  %947 = vst.msk [vmem:[%s3 + $0xb0] sm:$0xff] %vm924, %v914
  %948 = vst.msk [vmem:[%s3 + $0xb8] sm:$0xff] %vm924, %v915
  %949 = vst.msk [vmem:[%s3 + $0xc0] sm:$0xff] %vm924, %v916
  %950 = vst.msk [vmem:[%s3 + $0xc8] sm:$0xff] %vm924, %v917
  %951 = vst.msk [vmem:[%s3 + $0xd0] sm:$0xff] %vm924, %v918
  %952 = vst.msk [vmem:[%s3 + $0xd8] sm:$0xff] %vm924, %v919
  %953 = vst.msk [vmem:[%s3 + $0xe0] sm:$0xff] %vm924, %v920
  %954 = vst.msk [vmem:[%s3 + $0xe8] sm:$0xff] %vm924, %v921
  %955 = vst.msk [vmem:[%s3 + $0xf0] sm:$0xff] %vm924, %v922
  %956 = vst.msk [vmem:[%s3 + $0xf8] sm:$0xff] %vm924, %v923
  // Predicated region
  $region14: #{tpu_custom_call.1} parent=0 // pred_check
    _
  $region15: #{tpu_custom_call.1} parent=0 // pred_check_branch
    %958 = sbr.rel (0) target = $region17
  $region16: #{tpu_custom_call.1} parent=0 // pred_region
    _
  $region17: #{tpu_custom_call.1} parent=0 // pred_fallthru
    _
  // Predicated region
  $region18: #{tpu_custom_call.1} parent=0 // pred_check
    _
  $region19: #{tpu_custom_call.1} parent=0 // pred_check_branch
    %960 = sbr.rel (0) target = $region21
  $region20: #{tpu_custom_call.1} parent=0 // pred_region
    _
  $region21: #{tpu_custom_call.1} parent=0 // pred_fallthru
    _

</llo_original>
